<compile_context>
chip_gen: v7x
topology: tpu7x:2x2x1
jax: 0.10.0
libtpu: 0.0.40
codegen_flags: <defaults>
</compile_context>

<pallas_src>
import functools

import jax
import jax.numpy as jnp
from jax.experimental import pallas as pl
from jax.experimental.pallas import tpu as pltpu


def _round_up(a, b):
    return -(-a // b) * b


def _cdiv(a, b):
    return -(-a // b)


# ----------------------------- kernels ------------------------------------


def _quant_rowscale_kernel(x_ref, inv_ref, sout_ref, o_ref, *, min_val, max_val):
    # x_ref:    (blk_rows, blk_hw)  activation tile in its native dtype
    # inv_ref:  (blk_rows, 1)       per-row 1/in_scale (f32)
    # sout_ref: (blk_rows, 1)       per-row out_scale  (f32)
    x = x_ref[...].astype(jnp.float32)
    q = jnp.clip(jnp.round(x * inv_ref[...]), min_val, max_val)
    o_ref[...] = (q * sout_ref[...]).astype(o_ref.dtype)


def _quant_scalarscale_kernel(x_ref, inv_ref, sout_ref, o_ref, *, min_val, max_val):
    # inv_ref / sout_ref: (1, 1) f32 scalars resident in SMEM (not pipelined).
    inv = inv_ref[0, 0]
    so = sout_ref[0, 0]
    x = x_ref[...].astype(jnp.float32)
    q = jnp.clip(jnp.round(x * inv), min_val, max_val)
    o_ref[...] = (q * so).astype(o_ref.dtype)


# ----------------------------- tiling -------------------------------------


def _vmem_capacity_bytes():
    try:
        return int(pltpu.get_tpu_info().vmem_capacity_bytes)
    except Exception:
        return 64 << 20  # conservative (v7x per-TC); safe everywhere


def _choose_tiles(nc, hw, itemsize, target_bytes):
    """Pick (blk_rows, blk_hw, grid_rows, grid_lanes) without padding the array.

    Block dims are either multiples of the hardware tile (8*32/itemsize, 128)
    or exactly the full array dim, so ragged cdiv grids are always legal.
    """
    row_mult = max(8, 32 // max(1, itemsize))  # 8 f32 / 16 bf16 / 32 int8
    lane = 128

    # Lane tile: prefer the full row width (one contiguous DMA per block).
    if hw <= lane or row_mult * hw * itemsize <= target_bytes:
        blk_hw = hw
    else:
        units = max(1, target_bytes // (row_mult * itemsize * lane))
        blk_hw = min(_round_up(hw, lane), units * lane)
    grid_lanes = _cdiv(hw, blk_hw)

    # Row tile: fill up to ~target_bytes per block.
    rows = max(row_mult,
               (target_bytes // max(1, blk_hw * itemsize)) // row_mult * row_mult)
    rows = min(rows, _round_up(nc, row_mult))
    if rows >= nc:
        rows = nc  # full-dim block: always legal, no ragged edge at all
    grid_rows = _cdiv(nc, rows)

    # Megacore (v7x has 2 TCs): give the parallel row axis >= 2 steps for
    # non-trivial tensors so both cores get work.
    total_bytes = nc * hw * itemsize
    if (grid_rows * grid_lanes == 1 and nc >= 2 * row_mult
            and total_bytes > (1 << 20)):
        rows = _round_up(_cdiv(nc, 2), row_mult)
        grid_rows = _cdiv(nc, rows)

    return rows, blk_hw, grid_rows, grid_lanes


# ----------------------------- wrapper ------------------------------------


def act_quantizer_forward(x, in_scale, out_scale, *, signed=False, bit_width=8):
    """Pallas implementation of ActQuantizer.forward.

    x: (N, C, H, W) activation (NCHW, matching PyTorch).
    in_scale / out_scale: python float OR array of C per-channel scales.
    If both scales are None, returns x unchanged (matches the module).
    """
    if in_scale is None:
        assert out_scale is None
        return x

    # bit-width -> clamp range (same arithmetic as set_bitwidth)
    if signed:
        max_val = (1 << (bit_width - 1)) - 1
        min_val = -max_val
    else:
        max_val = (1 << bit_width) - 1
        min_val = 0

    N, C, H, W = x.shape
    NC, HW = N * C, H * W
    x2 = x.reshape(NC, HW)  # contiguous view, no copy, no dtype cast
    itemsize = jnp.dtype(x.dtype).itemsize

    # Generation-aware block budget (128 MiB VMEM v5e/v6e vs 64 MiB v7x).
    vmem = _vmem_capacity_bytes()
    if vmem >= (96 << 20):
        target_bytes, vmem_limit = 12 << 20, 80 << 20
    else:
        target_bytes, vmem_limit = 6 << 20, 48 << 20

    blk_rows, blk_hw, grid_rows, grid_lanes = _choose_tiles(
        NC, HW, itemsize, target_bytes)

    x_spec = pl.BlockSpec((blk_rows, blk_hw), lambda i, j: (i, j))
    out_spec = pl.BlockSpec((blk_rows, blk_hw), lambda i, j: (i, j))
    compiler_params = pltpu.CompilerParams(
        dimension_semantics=("parallel", "parallel"),
        vmem_limit_bytes=vmem_limit)
    out_shape = jax.ShapeDtypeStruct((NC, HW), x.dtype)

    scalar_scales = (jnp.ndim(in_scale) == 0) and (jnp.ndim(out_scale) == 0)

    if scalar_scales:
        # Fast path: two f32 scalars in SMEM, no per-row scale streams.
        inv = (1.0 / jnp.asarray(in_scale, jnp.float32)).reshape(1, 1)
        so = jnp.asarray(out_scale, jnp.float32).reshape(1, 1)
        out2 = pl.pallas_call(
            functools.partial(_quant_scalarscale_kernel,
                              min_val=float(min_val), max_val=float(max_val)),
            out_shape=out_shape,
            grid=(grid_rows, grid_lanes),
            in_specs=[
                x_spec,
                pl.BlockSpec(memory_space=pltpu.MemorySpace.SMEM),
                pl.BlockSpec(memory_space=pltpu.MemorySpace.SMEM),
            ],
            out_specs=out_spec,
            compiler_params=compiler_params,
        )(x2, inv, so)
    else:
        # Per-channel path: tiny per-row (NC, 1) scale columns, resident
        # across all inner lane steps (block index only changes with i).
        sin = jnp.broadcast_to(
            jnp.asarray(in_scale, jnp.float32).reshape(-1), (C,))
        sout = jnp.broadcast_to(
            jnp.asarray(out_scale, jnp.float32).reshape(-1), (C,))
        inv_rows = jnp.broadcast_to((1.0 / sin)[None, :], (N, C)).reshape(NC, 1)
        sout_rows = jnp.broadcast_to(sout[None, :], (N, C)).reshape(NC, 1)
        out2 = pl.pallas_call(
            functools.partial(_quant_rowscale_kernel,
                              min_val=float(min_val), max_val=float(max_val)),
            out_shape=out_shape,
            grid=(grid_rows, grid_lanes),
            in_specs=[
                x_spec,
                pl.BlockSpec((blk_rows, 1), lambda i, j: (i, 0)),
                pl.BlockSpec((blk_rows, 1), lambda i, j: (i, 0)),
            ],
            out_specs=out_spec,
            compiler_params=compiler_params,
        )(x2, inv_rows, sout_rows)

    return out2.reshape(N, C, H, W)


# ----------------------------- reference ----------------------------------


def _reference(x, in_scale, out_scale, *, signed=False, bit_width=8):
    """Plain-JAX reference mirroring the PyTorch forward.

    Uses the same reciprocal-multiply formulation as the kernel (the value fed
    to round() may differ from torch's true division by <=1 ulp at exact .5
    ties, which the perf review accepts).
    """
    if signed:
        max_val = (1 << (bit_width - 1)) - 1
        min_val = -max_val
    else:
        max_val = (1 << bit_width) - 1
        min_val = 0
    sin = jnp.asarray(in_scale, jnp.float32)
    sout = jnp.asarray(out_scale, jnp.float32)
    if sin.ndim:
        sin = sin.reshape(1, -1, 1, 1)
    if sout.ndim:
        sout = sout.reshape(1, -1, 1, 1)
    xf = x.astype(jnp.float32)
    q = jnp.clip(jnp.round(xf * (1.0 / sin)), min_val, max_val)
    return (q * sout).astype(x.dtype)


# TODO(synk): init_quantization (host-side numpy alternating-minimization for
# the calibration scale) is not part of forward() and is left un-kernelized.

if __name__ == "__main__":
    key = jax.random.PRNGKey(0)
    k1, k2, k3 = jax.random.split(key, 3)

    N, C, H, W = 2, 4, 16, 16
    x = jax.random.normal(k1, (N, C, H, W), dtype=jnp.float32) * 3.0 + 2.0

    # Deterministic per-channel scales (what set_scale installs after
    # calibration); unsigned 8-bit as in the default __init__ (islinear=False).
    per_channel_scale = jnp.array([0.02, 0.05, 0.01, 0.08], dtype=jnp.float32)

    out = act_quantizer_forward(x, per_channel_scale, per_channel_scale,
                                signed=False, bit_width=8)
    out = jax.block_until_ready(out)
    ref = _reference(x, per_channel_scale, per_channel_scale,
                     signed=False, bit_width=8)
    assert out.shape == (N, C, H, W)
    assert out.dtype == x.dtype
    assert jnp.allclose(out, ref, atol=1e-6), "per-channel mismatch"

    # Scalar-scale path (python float in_scale/out_scale -> SMEM fast path).
    out_s = jax.block_until_ready(
        act_quantizer_forward(x, 0.03, 0.03, signed=False, bit_width=8))
    ref_s = _reference(x, 0.03, 0.03, signed=False, bit_width=8)
    assert jnp.allclose(out_s, ref_s, atol=1e-6), "scalar-scale mismatch"

    # Ragged shape (HW not a multiple of 128, NC not a multiple of 8):
    # exercises the no-padding full-dim / ragged-block tiling.
    x3 = jax.random.normal(k2, (3, 5, 14, 14), dtype=jnp.float32) * 2.0 + 1.0
    sc3 = jnp.linspace(0.01, 0.09, 5, dtype=jnp.float32)
    out3 = jax.block_until_ready(
        act_quantizer_forward(x3, sc3, sc3, signed=False, bit_width=8))
    ref3 = _reference(x3, sc3, sc3, signed=False, bit_width=8)
    assert jnp.allclose(out3, ref3, atol=1e-6), "ragged-shape mismatch"

    # bf16 activation path: native-dtype DMA, f32 compute inside the kernel.
    xb = (jax.random.normal(k3, (N, C, H, W), dtype=jnp.float32) * 3.0
          + 2.0).astype(jnp.bfloat16)
    outb = jax.block_until_ready(
        act_quantizer_forward(xb, per_channel_scale, per_channel_scale,
                              signed=False, bit_width=8))
    refb = _reference(xb, per_channel_scale, per_channel_scale,
                      signed=False, bit_width=8)
    assert outb.dtype == jnp.bfloat16
    assert jnp.allclose(outb.astype(jnp.float32), refb.astype(jnp.float32),
                        atol=0.13), "bf16 mismatch"  # one bf16 ulp at max |out|

    print("KERNEL_OK")
</pallas_src>

<mosaic_0001>
module attributes {stable_mosaic.version = 11 : i64} {
  func.func @_quant_rowscale_kernel(%arg0: i32, %arg1: i32, %arg2: memref<8x256xf32, #tpu.memory_space<vmem>>, %arg3: memref<8x1xf32, #tpu.memory_space<vmem>>, %arg4: memref<8x1xf32, #tpu.memory_space<vmem>>, %arg5: memref<8x256xf32, #tpu.memory_space<vmem>>) attributes {dimension_semantics = [#tpu.dimension_semantics<parallel>, #tpu.dimension_semantics<parallel>], iteration_bounds = array<i64: 1, 1>, scalar_prefetch = 0 : i64, scratch_operands = 0 : i64, tpu.core_type = #tpu.core_type<tc>, window_params = [{transform_indices = @transform_0, window_bounds = array<i64: 8, 256>}, {transform_indices = @transform_1, window_bounds = array<i64: 8, 1>}, {transform_indices = @transform_2, window_bounds = array<i64: 8, 1>}, {transform_indices = @transform_3, window_bounds = array<i64: 8, 256>}]} {
    %c0 = arith.constant 0 : index
    %c0_0 = arith.constant 0 : index
    %0 = vector.load %arg2[%c0, %c0_0] : memref<8x256xf32, #tpu.memory_space<vmem>>, vector<8x256xf32>
    %c0_1 = arith.constant 0 : index
    %c0_2 = arith.constant 0 : index
    %1 = vector.load %arg3[%c0_1, %c0_2] : memref<8x1xf32, #tpu.memory_space<vmem>>, vector<8x1xf32>
    %2 = vector.broadcast %1 : vector<8x1xf32> to vector<8x256xf32>
    %3 = arith.mulf %0, %2 : vector<8x256xf32>
    %4 = math.roundeven %3 : vector<8x256xf32>
    %cst = arith.constant 0.000000e+00 : f32
    %cst_3 = arith.constant 2.550000e+02 : f32
    %5 = vector.broadcast %cst : f32 to vector<8x256xf32>
    %6 = arith.maximumf %5, %4 : vector<8x256xf32>
    %7 = vector.broadcast %cst_3 : f32 to vector<8x256xf32>
    %8 = arith.minimumf %7, %6 : vector<8x256xf32>
    %c0_4 = arith.constant 0 : index
    %c0_5 = arith.constant 0 : index
    %9 = vector.load %arg4[%c0_4, %c0_5] : memref<8x1xf32, #tpu.memory_space<vmem>>, vector<8x1xf32>
    %10 = vector.broadcast %9 : vector<8x1xf32> to vector<8x256xf32>
    %11 = arith.mulf %8, %10 : vector<8x256xf32>
    %c0_6 = arith.constant 0 : index
    %c0_7 = arith.constant 0 : index
    %12 = vector.load %arg5[%c0_6, %c0_7] : memref<8x256xf32, #tpu.memory_space<vmem>>, vector<8x256xf32>
    tpu.vector_store %arg5[%c0_6, %c0_7], %11 {strides = array<i32>} : memref<8x256xf32, #tpu.memory_space<vmem>>, vector<8x256xf32>,
    return
  }
  func.func @transform_0(%arg0: i32, %arg1: i32) -> (i32, i32) {
    %c0_i32 = arith.constant 0 : i32
    return %arg0, %arg1 : i32, i32
  }
  func.func @transform_1(%arg0: i32, %arg1: i32) -> (i32, i32) {
    %c0_i32 = arith.constant 0 : i32
    %c0_i32_0 = arith.constant 0 : i32
    return %arg0, %c0_i32 : i32, i32
  }
  func.func @transform_2(%arg0: i32, %arg1: i32) -> (i32, i32) {
    %c0_i32 = arith.constant 0 : i32
    %c0_i32_0 = arith.constant 0 : i32
    return %arg0, %c0_i32 : i32, i32
  }
  func.func @transform_3(%arg0: i32, %arg1: i32) -> (i32, i32) {
    %c0_i32 = arith.constant 0 : i32
    return %arg0, %arg1 : i32, i32
  }
}

</mosaic_0001>

<llo_original>
// kernel: tpu_custom_call.1
$region0: #{tpu_custom_call.1}
  #allocation0 [shape = 'u32[]', space=smem, size = 0x4, offset = 0x4, fixed_abs, tag = 'smem constant byte address 0x4 - core index']
  #allocation1 [shape = 'u32[144,128]{1,0:T(1,128)}', space=vmem, size = 0x12000, scoped, tag = 'internal scratch']
  %s0 = inlined_call_operand.vmem [shape: f32[8,256], index: 0, kind: input, shape index: {}]
  %s1 = inlined_call_operand.vmem [shape: f32[8,1], index: 1, kind: input, shape index: {}]
  %s2 = inlined_call_operand.vmem [shape: f32[8,1], index: 2, kind: input, shape index: {}]
  %s3 = inlined_call_operand.hbm [shape: f32[8,256], index: 3, kind: output, shape index: {}]
  %s4 = sld [smem:[#allocation0]]
  $region22: #{tpu_custom_call.1} parent=0
    _
  %s6 = ssub.s32 1, %s4
  %s7 = scalar_select 0, %s6, %s4
  $region1: #{tpu_custom_call.1} parent=0
    #allocation2 [shape = 'u8[8192]{0}', space=vmem, size = 0x2000, scoped, tag = 'output window, operand 0, single buffered']
    #allocation3 [shape = 's32[1]{0}', space=sflag, size = 0x4, scoped, tag = 'scoped memory for tpu_custom_call.1']
    %8 = vsyncpa [#allocation3], 0
    // Predicated region
    $region2: #{tpu_custom_call.1} parent=1 // pred_check
      _
    $region3: #{tpu_custom_call.1} parent=1 // pred_check_branch
      %10 = sbr.rel (0) target = $region5
    $region4: #{tpu_custom_call.1} parent=1 // pred_region
      _
    $region5: #{tpu_custom_call.1} parent=1 // pred_fallthru
      _
    // Predicated region
    $region6: #{tpu_custom_call.1} parent=1 // pred_check
      _
    $region7: #{tpu_custom_call.1} parent=1 // pred_check_branch
      %12 = sbr.rel (0) target = $region9
    $region8: #{tpu_custom_call.1} parent=1 // pred_region
      _
    $region9: #{tpu_custom_call.1} parent=1 // pred_fallthru
      _
    // Predicated region
    $region10: #{tpu_custom_call.1} parent=1 // pred_check
      _
    $region11: #{tpu_custom_call.1} parent=1 // pred_check_branch
      %14 = sbr.rel (0) target = $region13
    $region12: #{tpu_custom_call.1} parent=1 // pred_region
      _
    $region13: #{tpu_custom_call.1} parent=1 // pred_fallthru
      _
    %v15 = vld [vmem:[%s0] sm:$0xff]
    %v16 = vld [vmem:[%s0 + $0x8] sm:$0xff]
    %v17 = vld [vmem:[%s1] sm:$0xff]
    %19 = vset.pattern.permute.xlu0 0
    %20 = vperm.xlu0 %19, %v17
    %v21 = vpop.permute.xlu0 %20
    %v23 = vmul.f32 %v15, %v21
    %v24 = vmul.f32 %v16, %v21
    %v25 = vround.ne.pseudo %v23
    %v26 = vround.ne.pseudo %v24
    %v27 = vmax.f32 %v25, 0.0
    %v28 = vmax.f32 %v26, 0.0
    %v29 = vmin.f32 %v27, 255.0
    %v30 = vmin.f32 %v28, 255.0
    %v31 = vld [vmem:[%s2] sm:$0xff]
    %33 = vset.pattern.permute.xlu0 0
    %34 = vperm.xlu0 %33, %v31
    %v35 = vpop.permute.xlu0 %34
    %v37 = vmul.f32 %v29, %v35
    %v38 = vmul.f32 %v30, %v35
    %39 = vst [vmem:[#allocation2] sm:$0xff] %v37
    %40 = vst [vmem:[#allocation2 + $0x8] sm:$0xff] %v38
    // Predicated region
    $region14: #{tpu_custom_call.1} parent=1 // pred_check
      _
    $region15: #{tpu_custom_call.1} parent=1 // pred_check_branch
      %42 = sbr.rel (0) target = $region17
    $region16: #{tpu_custom_call.1} parent=1 // pred_region
      %s44 = ssub.s32 256, 256
      %45 = vsyncadd [#allocation3], %s44
      %s47 = sshll.u32 [#allocation2], 4
      %s48 = int_to_ptr.vmem [resolvable:$true] %s47
      %50 = dma.vmem_to_hbm [thread:$0]  %s48, 256, %s3, [#allocation3]
    $region17: #{tpu_custom_call.1} parent=1 // pred_fallthru
      _
    // Predicated region
    $region18: #{tpu_custom_call.1} parent=1 // pred_check
      _
    $region19: #{tpu_custom_call.1} parent=1 // pred_check_branch
      %52 = sbr.rel (0) target = $region21
    $region20: #{tpu_custom_call.1} parent=1 // pred_region
      %53 = dma.done [#allocation3], 256
    $region21: #{tpu_custom_call.1} parent=1 // pred_fallthru
      _
    %54 = vsyncpa [#allocation3], 1

</llo_original>
